<compile_context>
chip_gen: v7x
topology: tpu7x:2x2x1
jax: 0.10.0
libtpu: 0.0.40
codegen_flags: <defaults>
</compile_context>

<pallas_src>
import functools

import jax
import jax.numpy as jnp
from jax import lax
from jax.experimental import pallas as pl
from jax.experimental.pallas import tpu as pltpu


def _round_up(x, m):
    return ((x + m - 1) // m) * m


def minrnn_kernel(x_ref, wg_ref, bg_ref, wo_ref, bo_ref, out_ref,
                  h_scr, a_scr, b_scr, *,
                  units, chunk, batch_block, seq_len, time_padded):
    """Grid = (batch_blocks, time_chunks); the time axis carries h sequentially."""
    c = pl.program_id(1)

    # h_0 = 0 (re-init at the start of every batch block's time loop)
    @pl.when(c == 0)
    def _():
        h_scr[...] = jnp.zeros_like(h_scr)

    U = units
    Bb = batch_block
    E = x_ref.shape[-1]

    # ---- chunk-wide projection + gate math (independent of h -> off the serial
    #      chain).  One big MXU push with M = chunk*Bb rows instead of `chunk`
    #      tiny (Bb, E) matmuls. ----
    x = x_ref[...].reshape(chunk * Bb, E)
    z = jnp.dot(x, wg_ref[...], preferred_element_type=jnp.float32) + bg_ref[...]
    f_g = jax.nn.sigmoid(z[:, 0:U])
    i_g = jax.nn.sigmoid(z[:, U:2 * U])
    h_tl = z[:, 2 * U:3 * U]
    s = f_g + i_g
    inv = pl.reciprocal(s, approx=True)
    inv = inv * (2.0 - s * inv)            # one Newton step -> ~exact 1/s
    a = (f_g * inv).reshape(chunk, Bb, U)
    b = (i_g * inv * h_tl).reshape(chunk, Bb, U)

    if time_padded:                        # static Python bool: only emitted if T padded
        t_idx = lax.broadcasted_iota(jnp.int32, (chunk, Bb, U), 0) + c * chunk
        valid = t_idx < seq_len
        a = jnp.where(valid, a, 1.0)       # identity update for padded timesteps
        b = jnp.where(valid, b, 0.0)

    a_scr[...] = a
    b_scr[...] = b

    # ---- serial recurrence: two VPU ops per timestep ----
    def step(t, h):
        return a_scr[t] * h + b_scr[t]

    h = lax.fori_loop(0, chunk, step, h_scr[...],
                      unroll=True if chunk <= 64 else 8)
    h_scr[...] = h

    # ---- folded classification head on the final hidden state ----
    @pl.when(c == pl.num_programs(1) - 1)
    def _():
        logits = jnp.dot(h, wo_ref[...],
                         preferred_element_type=jnp.float32) + bo_ref[...]
        out_ref[...] = jax.nn.sigmoid(logits)


def minrnn_forward(sentence, params, *, batch_block=None, time_chunk=None,
                   matmul_dtype=jnp.float32,
                   vmem_budget_bytes=12 * 1024 * 1024):
    """sentence: (B, T, E) float32.  Returns (B, 1) float32."""
    B, T, E = sentence.shape
    U = params["wf"].shape[1]
    x_bytes = jnp.dtype(matmul_dtype).itemsize
    sublane = 8 if x_bytes == 4 else 16    # bf16 needs 16-row sublane packing

    # --- fuse the three recurrence projections, pad to a full 128-lane group ---
    Hpad = _round_up(3 * U, 128)
    wg = jnp.concatenate([params["wf"], params["wi"], params["wh"]], axis=1)
    wg = jnp.pad(wg, ((0, 0), (0, Hpad - 3 * U))).astype(matmul_dtype)
    bg = jnp.concatenate([params["bf"], params["bi"], params["bh"]], axis=1)
    bg = jnp.pad(bg, ((0, 0), (0, Hpad - 3 * U))).astype(jnp.float32)

    # --- fold the activation-free 2-layer head into one (U, 1) projection ---
    wo = (params["w1"] @ params["w2"]).astype(jnp.float32)                 # (U, 1)
    bo = (params["b1"] @ params["w2"] + params["b2"]).astype(jnp.float32)  # (1, 1)

    # --- batch tiling: large blocks for MXU row utilization, but keep >= 2 batch
    #     blocks (when B allows) so v7x's 2nd TensorCore gets parallel work. ---
    if batch_block is None:
        if B <= sublane:
            batch_block = sublane
        else:
            batch_block = min(256, _round_up(-(-B // 2), sublane))
    batch_block = _round_up(batch_block, sublane)
    Bpad = _round_up(B, batch_block)

    # --- time chunk: budget the per-step VMEM live set (2x double-buffered x chunk
    #     + the chunk-wide a/b scratch); pad T and mask in-kernel. ---
    if time_chunk is None:
        per_step = 2 * batch_block * E * x_bytes + 2 * batch_block * U * 4
        time_chunk = int(max(1, min(T, 256, vmem_budget_bytes // per_step)))
    Tpad = _round_up(T, time_chunk)
    time_padded = Tpad != T

    x = sentence
    if Bpad != B:
        x = jnp.pad(x, ((0, Bpad - B), (0, 0), (0, 0)))
    if time_padded:
        x = jnp.pad(x, ((0, 0), (0, Tpad - T), (0, 0)))
    # Time-major so each grid step sees a contiguous (chunk, Bb, E) slab.
    x_tm = jnp.transpose(x, (1, 0, 2)).astype(matmul_dtype)       # (Tpad, Bpad, E)

    # --- explicit VMEM limit derived from the live set (headroom x2, capped so it
    #     stays safe on v7x's 64 MiB physical VMEM). ---
    est = (2 * time_chunk * batch_block * E * x_bytes          # x double buffer
           + 2 * (E * Hpad * x_bytes + Hpad * 4)               # wg / bg buffers
           + 2 * (U * 4 + 4)                                   # wo / bo buffers
           + batch_block * U * 4                               # h scratch
           + 2 * time_chunk * batch_block * U * 4              # a / b scratch
           + 2 * batch_block * 4)                              # out buffer
    vmem_limit = int(min(max(2 * est, 16 * 1024 * 1024), 48 * 1024 * 1024))

    kernel = functools.partial(
        minrnn_kernel, units=U, chunk=time_chunk, batch_block=batch_block,
        seq_len=T, time_padded=time_padded)

    out = pl.pallas_call(
        kernel,
        out_shape=jax.ShapeDtypeStruct((Bpad, 1), jnp.float32),
        grid=(Bpad // batch_block, Tpad // time_chunk),
        in_specs=[
            pl.BlockSpec((time_chunk, batch_block, E), lambda b, c: (c, b, 0)),
            pl.BlockSpec((E, Hpad), lambda b, c: (0, 0)),   # fused gate weights
            pl.BlockSpec((1, Hpad), lambda b, c: (0, 0)),   # fused gate biases
            pl.BlockSpec((U, 1), lambda b, c: (0, 0)),      # folded head weight
            pl.BlockSpec((1, 1), lambda b, c: (0, 0)),      # folded head bias
        ],
        out_specs=pl.BlockSpec((batch_block, 1), lambda b, c: (b, 0)),
        scratch_shapes=[
            pltpu.VMEM((batch_block, U), jnp.float32),                  # h carry
            pltpu.VMEM((time_chunk, batch_block, U), jnp.float32),      # a = f'
            pltpu.VMEM((time_chunk, batch_block, U), jnp.float32),      # b = i'*h~
        ],
        compiler_params=pltpu.CompilerParams(
            dimension_semantics=("parallel", "arbitrary"),
            vmem_limit_bytes=vmem_limit),
    )(x_tm, wg, bg, wo, bo)
    return out[:B]


def minrnn_reference(sentence, params):
    """Plain-JAX reference mirroring the PyTorch forward pass (unfused, unfolded)."""
    B, T, E = sentence.shape
    U = params["wf"].shape[1]
    h = jnp.zeros((B, U), jnp.float32)
    for i in range(T):
        x_t = sentence[:, i, :]
        f = jax.nn.sigmoid(x_t @ params["wf"] + params["bf"])
        g = jax.nn.sigmoid(x_t @ params["wi"] + params["bi"])
        ht = x_t @ params["wh"] + params["bh"]
        s = f + g
        h = (f / s) * h + (g / s) * ht
    z1 = h @ params["w1"] + params["b1"]
    z2 = z1 @ params["w2"] + params["b2"]
    return jax.nn.sigmoid(z2)


def init_params(key, units, embedding_size, hidden1=64):
    """Deterministic parameter init. Weights stored as (in, out) == W.T of PyTorch."""
    ks = jax.random.split(key, 10)

    def lin(kw, kb, fan_in, fan_out):
        bound = 1.0 / jnp.sqrt(fan_in)
        w = jax.random.uniform(kw, (fan_in, fan_out), jnp.float32, -bound, bound)
        b = jax.random.uniform(kb, (1, fan_out), jnp.float32, -bound, bound)
        return w, b

    wf, bf = lin(ks[0], ks[1], embedding_size, units)
    wi, bi = lin(ks[2], ks[3], embedding_size, units)
    wh, bh = lin(ks[4], ks[5], embedding_size, units)
    w1, b1 = lin(ks[6], ks[7], units, hidden1)
    w2, b2 = lin(ks[8], ks[9], hidden1, 1)
    return dict(wf=wf, bf=bf, wi=wi, bi=bi, wh=wh, bh=bh,
                w1=w1, b1=b1, w2=w2, b2=b2)


if __name__ == "__main__":
    B, T, E, U = 16, 8, 32, 32
    key = jax.random.PRNGKey(0)
    k_x, k_p = jax.random.split(key)
    sentence = jax.random.normal(k_x, (B, T, E), jnp.float32)
    params = init_params(k_p, units=U, embedding_size=E)

    out = jax.block_until_ready(minrnn_forward(sentence, params))
    ref = minrnn_reference(sentence, params)

    assert out.shape == (B, 1)
    # folded head + Newton-refined reciprocal leave only tiny f32 drift
    assert jnp.allclose(out, ref, atol=2e-3, rtol=2e-3), (out, ref)

    print("KERNEL_OK")
</pallas_src>

<mosaic_0001>
module attributes {stable_mosaic.version = 11 : i64} {
  func.func @minrnn_kernel(%arg0: i32, %arg1: i32, %arg2: memref<8x8x32xf32, #tpu.memory_space<vmem>>, %arg3: memref<32x128xf32, #tpu.memory_space<vmem>>, %arg4: memref<1x128xf32, #tpu.memory_space<vmem>>, %arg5: memref<32x1xf32, #tpu.memory_space<vmem>>, %arg6: memref<1x1xf32, #tpu.memory_space<vmem>>, %arg7: memref<8x1xf32, #tpu.memory_space<vmem>>, %arg8: memref<8x32xf32, #tpu.memory_space<vmem>>, %arg9: memref<8x8x32xf32, #tpu.memory_space<vmem>>, %arg10: memref<8x8x32xf32, #tpu.memory_space<vmem>>) attributes {dimension_semantics = [#tpu.dimension_semantics<parallel>, #tpu.dimension_semantics<arbitrary>], iteration_bounds = array<i64: 2, 1>, scalar_prefetch = 0 : i64, scratch_operands = 3 : i64, tpu.core_type = #tpu.core_type<tc>, window_params = [{transform_indices = @transform_0, window_bounds = array<i64: 8, 8, 32>}, {pipeline_mode = #tpu.pipeline_mode<synchronous>, transform_indices = @transform_1, window_bounds = array<i64: 32, 128>}, {pipeline_mode = #tpu.pipeline_mode<synchronous>, transform_indices = @transform_2, window_bounds = array<i64: 1, 128>}, {pipeline_mode = #tpu.pipeline_mode<synchronous>, transform_indices = @transform_3, window_bounds = array<i64: 32, 1>}, {pipeline_mode = #tpu.pipeline_mode<synchronous>, transform_indices = @transform_4, window_bounds = array<i64: 1, 1>}, {transform_indices = @transform_5, window_bounds = array<i64: 8, 1>}]} {
    %c0_i32 = arith.constant 0 : i32
    %0 = arith.cmpi eq, %arg1, %c0_i32 : i32
    %1 = arith.extui %0 : i1 to i32
    %c0_i32_0 = arith.constant 0 : i32
    %2 = arith.cmpi ne, %1, %c0_i32_0 : i32
    scf.if %2 {
      %cst_55 = arith.constant 0.000000e+00 : f32
      %105 = vector.broadcast %cst_55 : f32 to vector<8x32xf32>
      %c0_56 = arith.constant 0 : index
      %c0_57 = arith.constant 0 : index
      %106 = vector.load %arg8[%c0_56, %c0_57] : memref<8x32xf32, #tpu.memory_space<vmem>>, vector<8x32xf32>
      tpu.vector_store %arg8[%c0_56, %c0_57], %105 {strides = array<i32>} : memref<8x32xf32, #tpu.memory_space<vmem>>, vector<8x32xf32>,
    } else {
    }
    %c0 = arith.constant 0 : index
    %c0_1 = arith.constant 0 : index
    %c0_2 = arith.constant 0 : index
    %3 = vector.load %arg2[%c0, %c0_1, %c0_2] : memref<8x8x32xf32, #tpu.memory_space<vmem>>, vector<8x8x32xf32>
    %4 = vector.shape_cast %3 : vector<8x8x32xf32> to vector<64x32xf32>
    %c0_3 = arith.constant 0 : index
    %c0_4 = arith.constant 0 : index
    %5 = vector.load %arg3[%c0_3, %c0_4] : memref<32x128xf32, #tpu.memory_space<vmem>>, vector<32x128xf32>
    %cst = arith.constant dense<0.000000e+00> : vector<64x128xf32>
    %6 = tpu.matmul %4, %5, %cst {dimension_numbers = #tpu.dot_dimension_numbers<[1], [0], [0], [1], [0, 0, 1, 1], [], []>} : vector<64x32xf32>, vector<32x128xf32>, vector<64x128xf32> -> vector<64x128xf32>
    %c0_5 = arith.constant 0 : index
    %c0_6 = arith.constant 0 : index
    %7 = vector.load %arg4[%c0_5, %c0_6] : memref<1x128xf32, #tpu.memory_space<vmem>>, vector<1x128xf32>
    %8 = vector.broadcast %7 : vector<1x128xf32> to vector<64x128xf32>
    %9 = arith.addf %6, %8 : vector<64x128xf32>
    %10 = vector.extract_strided_slice %9 {offsets = [0, 0], sizes = [64, 32], strides = [1, 1]} : vector<64x128xf32> to vector<64x32xf32>
    %11 = arith.negf %10 : vector<64x32xf32>
    %12 = math.exp %11 : vector<64x32xf32>
    %cst_7 = arith.constant 1.000000e+00 : f32
    %13 = vector.broadcast %cst_7 : f32 to vector<64x32xf32>
    %14 = arith.addf %13, %12 : vector<64x32xf32>
    %15 = arith.divf %13, %14 : vector<64x32xf32>
    %16 = vector.extract_strided_slice %9 {offsets = [0, 32], sizes = [64, 32], strides = [1, 1]} : vector<64x128xf32> to vector<64x32xf32>
    %17 = arith.negf %16 : vector<64x32xf32>
    %18 = math.exp %17 : vector<64x32xf32>
    %cst_8 = arith.constant 1.000000e+00 : f32
    %19 = vector.broadcast %cst_8 : f32 to vector<64x32xf32>
    %20 = arith.addf %19, %18 : vector<64x32xf32>
    %21 = arith.divf %19, %20 : vector<64x32xf32>
    %22 = vector.extract_strided_slice %9 {offsets = [0, 64], sizes = [64, 32], strides = [1, 1]} : vector<64x128xf32> to vector<64x32xf32>
    %23 = arith.addf %15, %21 : vector<64x32xf32>
    %24 = tpu.reciprocal %23 {approx = true} : vector<64x32xf32> -> vector<64x32xf32>
    %25 = arith.mulf %23, %24 : vector<64x32xf32>
    %cst_9 = arith.constant 2.000000e+00 : f32
    %26 = vector.broadcast %cst_9 : f32 to vector<64x32xf32>
    %27 = arith.subf %26, %25 : vector<64x32xf32>
    %28 = arith.mulf %24, %27 : vector<64x32xf32>
    %29 = arith.mulf %15, %28 : vector<64x32xf32>
    %30 = vector.shape_cast %29 : vector<64x32xf32> to vector<8x8x32xf32>
    %31 = arith.mulf %21, %28 : vector<64x32xf32>
    %32 = arith.mulf %31, %22 : vector<64x32xf32>
    %33 = vector.shape_cast %32 : vector<64x32xf32> to vector<8x8x32xf32>
    %c0_10 = arith.constant 0 : index
    %c0_11 = arith.constant 0 : index
    %c0_12 = arith.constant 0 : index
    %34 = vector.load %arg9[%c0_10, %c0_11, %c0_12] : memref<8x8x32xf32, #tpu.memory_space<vmem>>, vector<8x8x32xf32>
    tpu.vector_store %arg9[%c0_10, %c0_11, %c0_12], %30 {strides = array<i32>} : memref<8x8x32xf32, #tpu.memory_space<vmem>>, vector<8x8x32xf32>,
    %c0_13 = arith.constant 0 : index
    %c0_14 = arith.constant 0 : index
    %c0_15 = arith.constant 0 : index
    %35 = vector.load %arg10[%c0_13, %c0_14, %c0_15] : memref<8x8x32xf32, #tpu.memory_space<vmem>>, vector<8x8x32xf32>
    tpu.vector_store %arg10[%c0_13, %c0_14, %c0_15], %33 {strides = array<i32>} : memref<8x8x32xf32, #tpu.memory_space<vmem>>, vector<8x8x32xf32>,
    %c0_16 = arith.constant 0 : index
    %c0_17 = arith.constant 0 : index
    %36 = vector.load %arg8[%c0_16, %c0_17] : memref<8x32xf32, #tpu.memory_space<vmem>>, vector<8x32xf32>
    %c0_i32_18 = arith.constant 0 : i32
    %37 = arith.index_cast %c0_i32_18 : i32 to index
    %c0_19 = arith.constant 0 : index
    %c0_20 = arith.constant 0 : index
    %38 = vector.load %arg9[%37, %c0_19, %c0_20] : memref<8x8x32xf32, #tpu.memory_space<vmem>>, vector<1x8x32xf32>
    %39 = vector.shape_cast %38 : vector<1x8x32xf32> to vector<8x32xf32>
    %40 = arith.mulf %39, %36 : vector<8x32xf32>
    %41 = arith.index_cast %c0_i32_18 : i32 to index
    %c0_21 = arith.constant 0 : index
    %c0_22 = arith.constant 0 : index
    %42 = vector.load %arg10[%41, %c0_21, %c0_22] : memref<8x8x32xf32, #tpu.memory_space<vmem>>, vector<1x8x32xf32>
    %43 = vector.shape_cast %42 : vector<1x8x32xf32> to vector<8x32xf32>
    %44 = arith.addf %40, %43 : vector<8x32xf32>
    %c1_i32 = arith.constant 1 : i32
    %45 = arith.index_cast %c1_i32 : i32 to index
    %c0_23 = arith.constant 0 : index
    %c0_24 = arith.constant 0 : index
    %46 = vector.load %arg9[%45, %c0_23, %c0_24] : memref<8x8x32xf32, #tpu.memory_space<vmem>>, vector<1x8x32xf32>
    %47 = vector.shape_cast %46 : vector<1x8x32xf32> to vector<8x32xf32>
    %48 = arith.mulf %47, %44 : vector<8x32xf32>
    %49 = arith.index_cast %c1_i32 : i32 to index
    %c0_25 = arith.constant 0 : index
    %c0_26 = arith.constant 0 : index
    %50 = vector.load %arg10[%49, %c0_25, %c0_26] : memref<8x8x32xf32, #tpu.memory_space<vmem>>, vector<1x8x32xf32>
    %51 = vector.shape_cast %50 : vector<1x8x32xf32> to vector<8x32xf32>
    %52 = arith.addf %48, %51 : vector<8x32xf32>
    %c2_i32 = arith.constant 2 : i32
    %53 = arith.index_cast %c2_i32 : i32 to index
    %c0_27 = arith.constant 0 : index
    %c0_28 = arith.constant 0 : index
    %54 = vector.load %arg9[%53, %c0_27, %c0_28] : memref<8x8x32xf32, #tpu.memory_space<vmem>>, vector<1x8x32xf32>
    %55 = vector.shape_cast %54 : vector<1x8x32xf32> to vector<8x32xf32>
    %56 = arith.mulf %55, %52 : vector<8x32xf32>
    %57 = arith.index_cast %c2_i32 : i32 to index
    %c0_29 = arith.constant 0 : index
    %c0_30 = arith.constant 0 : index
    %58 = vector.load %arg10[%57, %c0_29, %c0_30] : memref<8x8x32xf32, #tpu.memory_space<vmem>>, vector<1x8x32xf32>
    %59 = vector.shape_cast %58 : vector<1x8x32xf32> to vector<8x32xf32>
    %60 = arith.addf %56, %59 : vector<8x32xf32>
    %c3_i32 = arith.constant 3 : i32
    %61 = arith.index_cast %c3_i32 : i32 to index
    %c0_31 = arith.constant 0 : index
    %c0_32 = arith.constant 0 : index
    %62 = vector.load %arg9[%61, %c0_31, %c0_32] : memref<8x8x32xf32, #tpu.memory_space<vmem>>, vector<1x8x32xf32>
    %63 = vector.shape_cast %62 : vector<1x8x32xf32> to vector<8x32xf32>
    %64 = arith.mulf %63, %60 : vector<8x32xf32>
    %65 = arith.index_cast %c3_i32 : i32 to index
    %c0_33 = arith.constant 0 : index
    %c0_34 = arith.constant 0 : index
    %66 = vector.load %arg10[%65, %c0_33, %c0_34] : memref<8x8x32xf32, #tpu.memory_space<vmem>>, vector<1x8x32xf32>
    %67 = vector.shape_cast %66 : vector<1x8x32xf32> to vector<8x32xf32>
    %68 = arith.addf %64, %67 : vector<8x32xf32>
    %c4_i32 = arith.constant 4 : i32
    %69 = arith.index_cast %c4_i32 : i32 to index
    %c0_35 = arith.constant 0 : index
    %c0_36 = arith.constant 0 : index
    %70 = vector.load %arg9[%69, %c0_35, %c0_36] : memref<8x8x32xf32, #tpu.memory_space<vmem>>, vector<1x8x32xf32>
    %71 = vector.shape_cast %70 : vector<1x8x32xf32> to vector<8x32xf32>
    %72 = arith.mulf %71, %68 : vector<8x32xf32>
    %73 = arith.index_cast %c4_i32 : i32 to index
    %c0_37 = arith.constant 0 : index
    %c0_38 = arith.constant 0 : index
    %74 = vector.load %arg10[%73, %c0_37, %c0_38] : memref<8x8x32xf32, #tpu.memory_space<vmem>>, vector<1x8x32xf32>
    %75 = vector.shape_cast %74 : vector<1x8x32xf32> to vector<8x32xf32>
    %76 = arith.addf %72, %75 : vector<8x32xf32>
    %c5_i32 = arith.constant 5 : i32
    %77 = arith.index_cast %c5_i32 : i32 to index
    %c0_39 = arith.constant 0 : index
    %c0_40 = arith.constant 0 : index
    %78 = vector.load %arg9[%77, %c0_39, %c0_40] : memref<8x8x32xf32, #tpu.memory_space<vmem>>, vector<1x8x32xf32>
    %79 = vector.shape_cast %78 : vector<1x8x32xf32> to vector<8x32xf32>
    %80 = arith.mulf %79, %76 : vector<8x32xf32>
    %81 = arith.index_cast %c5_i32 : i32 to index
    %c0_41 = arith.constant 0 : index
    %c0_42 = arith.constant 0 : index
    %82 = vector.load %arg10[%81, %c0_41, %c0_42] : memref<8x8x32xf32, #tpu.memory_space<vmem>>, vector<1x8x32xf32>
    %83 = vector.shape_cast %82 : vector<1x8x32xf32> to vector<8x32xf32>
    %84 = arith.addf %80, %83 : vector<8x32xf32>
    %c6_i32 = arith.constant 6 : i32
    %85 = arith.index_cast %c6_i32 : i32 to index
    %c0_43 = arith.constant 0 : index
    %c0_44 = arith.constant 0 : index
    %86 = vector.load %arg9[%85, %c0_43, %c0_44] : memref<8x8x32xf32, #tpu.memory_space<vmem>>, vector<1x8x32xf32>
    %87 = vector.shape_cast %86 : vector<1x8x32xf32> to vector<8x32xf32>
    %88 = arith.mulf %87, %84 : vector<8x32xf32>
    %89 = arith.index_cast %c6_i32 : i32 to index
    %c0_45 = arith.constant 0 : index
    %c0_46 = arith.constant 0 : index
    %90 = vector.load %arg10[%89, %c0_45, %c0_46] : memref<8x8x32xf32, #tpu.memory_space<vmem>>, vector<1x8x32xf32>
    %91 = vector.shape_cast %90 : vector<1x8x32xf32> to vector<8x32xf32>
    %92 = arith.addf %88, %91 : vector<8x32xf32>
    %c7_i32 = arith.constant 7 : i32
    %93 = arith.index_cast %c7_i32 : i32 to index
    %c0_47 = arith.constant 0 : index
    %c0_48 = arith.constant 0 : index
    %94 = vector.load %arg9[%93, %c0_47, %c0_48] : memref<8x8x32xf32, #tpu.memory_space<vmem>>, vector<1x8x32xf32>
    %95 = vector.shape_cast %94 : vector<1x8x32xf32> to vector<8x32xf32>
    %96 = arith.mulf %95, %92 : vector<8x32xf32>
    %97 = arith.index_cast %c7_i32 : i32 to index
    %c0_49 = arith.constant 0 : index
    %c0_50 = arith.constant 0 : index
    %98 = vector.load %arg10[%97, %c0_49, %c0_50] : memref<8x8x32xf32, #tpu.memory_space<vmem>>, vector<1x8x32xf32>
    %99 = vector.shape_cast %98 : vector<1x8x32xf32> to vector<8x32xf32>
    %100 = arith.addf %96, %99 : vector<8x32xf32>
    %c8_i32 = arith.constant 8 : i32
    %c0_51 = arith.constant 0 : index
    %c0_52 = arith.constant 0 : index
    %101 = vector.load %arg8[%c0_51, %c0_52] : memref<8x32xf32, #tpu.memory_space<vmem>>, vector<8x32xf32>
    tpu.vector_store %arg8[%c0_51, %c0_52], %100 {strides = array<i32>} : memref<8x32xf32, #tpu.memory_space<vmem>>, vector<8x32xf32>,
    %c0_i32_53 = arith.constant 0 : i32
    %102 = arith.cmpi eq, %arg1, %c0_i32_53 : i32
    %103 = arith.extui %102 : i1 to i32
    %c0_i32_54 = arith.constant 0 : i32
    %104 = arith.cmpi ne, %103, %c0_i32_54 : i32
    scf.if %104 {
      %c0_55 = arith.constant 0 : index
      %c0_56 = arith.constant 0 : index
      %105 = vector.load %arg5[%c0_55, %c0_56] : memref<32x1xf32, #tpu.memory_space<vmem>>, vector<32x1xf32>
      %cst_57 = arith.constant dense<0.000000e+00> : vector<8x1xf32>
      %106 = tpu.matmul %100, %105, %cst_57 {dimension_numbers = #tpu.dot_dimension_numbers<[1], [0], [0], [1], [0, 0, 1, 1], [], []>} : vector<8x32xf32>, vector<32x1xf32>, vector<8x1xf32> -> vector<8x1xf32>
      %c0_58 = arith.constant 0 : index
      %c0_59 = arith.constant 0 : index
      %107 = vector.load %arg6[%c0_58, %c0_59] : memref<1x1xf32, #tpu.memory_space<vmem>>, vector<1x1xf32>
      %108 = vector.broadcast %107 : vector<1x1xf32> to vector<8x1xf32>
      %109 = arith.addf %106, %108 : vector<8x1xf32>
      %110 = arith.negf %109 : vector<8x1xf32>
      %111 = math.exp %110 : vector<8x1xf32>
      %cst_60 = arith.constant 1.000000e+00 : f32
      %112 = vector.broadcast %cst_60 : f32 to vector<8x1xf32>
      %113 = arith.addf %112, %111 : vector<8x1xf32>
      %114 = arith.divf %112, %113 : vector<8x1xf32>
      %c0_61 = arith.constant 0 : index
      %c0_62 = arith.constant 0 : index
      %115 = vector.load %arg7[%c0_61, %c0_62] : memref<8x1xf32, #tpu.memory_space<vmem>>, vector<8x1xf32>
      tpu.vector_store %arg7[%c0_61, %c0_62], %114 {strides = array<i32>} : memref<8x1xf32, #tpu.memory_space<vmem>>, vector<8x1xf32>,
    } else {
    }
    return
  }
  func.func @transform_0(%arg0: i32, %arg1: i32) -> (i32, i32, i32) {
    %c0_i32 = arith.constant 0 : i32
    %c0_i32_0 = arith.constant 0 : i32
    return %arg1, %arg0, %c0_i32 : i32, i32, i32
  }
  func.func @transform_1(%arg0: i32, %arg1: i32) -> (i32, i32) {
    %c0_i32 = arith.constant 0 : i32
    %c0_i32_0 = arith.constant 0 : i32
    %c0_i32_1 = arith.constant 0 : i32
    return %c0_i32, %c0_i32_0 : i32, i32
  }
  func.func @transform_2(%arg0: i32, %arg1: i32) -> (i32, i32) {
    %c0_i32 = arith.constant 0 : i32
    %c0_i32_0 = arith.constant 0 : i32
    %c0_i32_1 = arith.constant 0 : i32
    return %c0_i32, %c0_i32_0 : i32, i32
  }
  func.func @transform_3(%arg0: i32, %arg1: i32) -> (i32, i32) {
    %c0_i32 = arith.constant 0 : i32
    %c0_i32_0 = arith.constant 0 : i32
    %c0_i32_1 = arith.constant 0 : i32
    return %c0_i32, %c0_i32_0 : i32, i32
  }
  func.func @transform_4(%arg0: i32, %arg1: i32) -> (i32, i32) {
    %c0_i32 = arith.constant 0 : i32
    %c0_i32_0 = arith.constant 0 : i32
    %c0_i32_1 = arith.constant 0 : i32
    return %c0_i32, %c0_i32_0 : i32, i32
  }
  func.func @transform_5(%arg0: i32, %arg1: i32) -> (i32, i32) {
    %c0_i32 = arith.constant 0 : i32
    %c0_i32_0 = arith.constant 0 : i32
    return %arg0, %c0_i32 : i32, i32
  }
}

</mosaic_0001>

<llo_original>
// kernel: tpu_custom_call.1
$region0: #{tpu_custom_call.1}
  #allocation0 [shape = 'u32[]', space=smem, size = 0x4, offset = 0x4, fixed_abs, tag = 'smem constant byte address 0x4 - core index']
  #allocation1 [shape = 'u32[144,128]{1,0:T(1,128)}', space=vmem, size = 0x12000, scoped, tag = 'internal scratch']
  #allocation2 [shape = 'f32[8,32]{1,0:T(8,128)}', space=vmem, size = 0x1000, scoped, tag = 'scratch operand']
  #allocation3 [shape = 'f32[8,8,32]{2,1,0:T(8,128)}', space=vmem, size = 0x8000, scoped, tag = 'scratch operand']
  #allocation4 [shape = 'f32[8,8,32]{2,1,0:T(8,128)}', space=vmem, size = 0x8000, scoped, tag = 'scratch operand']
  #allocation5 [shape = 'f32[1,1]{1,0:T(1,128)S(1)}', space=vmem, size = 0x200, scoped, tag = 'scoped memory for tpu_custom_call.1']
  %s0 = inlined_call_operand.hbm [shape: f32[8,16,32], index: 0, kind: input, shape index: {}]
  %s1 = inlined_call_operand.vmem [shape: f32[32,128], index: 1, kind: input, shape index: {}]
  %s2 = inlined_call_operand.vmem [shape: f32[1,128], index: 2, kind: input, shape index: {}]
  %s3 = inlined_call_operand.vmem [shape: f32[32,1], index: 3, kind: input, shape index: {}]
  %s4 = inlined_call_operand.<no memory space> [shape: f32[1,1], index: 4, kind: input, shape index: {}]
  %s5 = inlined_call_operand.vmem [shape: f32[16,1], index: 5, kind: output, shape index: {}]
  %s6 = sld [smem:[#allocation0]]
  $region65: #{tpu_custom_call.1} parent=0
    _
  %s8 = ssub.s32 1, %s6
  %s9 = scalar_select 0, %s8, %s6
  %v10 = vstv %s4
  %11 = vst [vmem:[#allocation5] sm:$0x1] %v10
  $region1: #{tpu_custom_call.1} parent=0
    #allocation6 [shape = 'u8[65536]{0}', space=vmem, size = 0x10000, scoped, tag = 'input window, operand 0']
    #allocation7 [shape = 's32[2]{0}', space=sflag, size = 0x8, scoped, tag = 'scoped memory for tpu_custom_call.1']
    %12 = vsyncpa [#allocation7], 0
    %s13 = scalar_lea.sflag [#allocation7], 1
    %14 = vsyncpa %s13, 0
    loop: start=0, step=1, limit=4
    $region2: #{tpu_custom_call.1} parent=1 // loop_pre_header
      _
    $region3: #{tpu_custom_call.1} parent=1 // loop_header
      %s16 = sphi 0, %s20
      %p17 = scmp.ge.s32.totalorder %s16, 4
      %s23 = sphi 0, %s35
      %s24 = sphi 0, %s31
      %s25 = sphi 0, %s23
      %s26 = sphi 0, %s24
      %s27 = sphi 0, %s25
      %s28 = sphi 0, %s26
      %s40 = sphi 0, %s42
      %s43 = sphi 0, %s40
      %s44 = sphi 0, %s43
      %s60 = sphi 0, %s44
      %s64 = sphi 0, %s64
      %s66 = sphi 0, %s64
      %s67 = sphi 0, %s66
      %s81 = sphi 0, %s67
      %s85 = sphi 0, %s85
      %s87 = sphi 0, %s85
      %s88 = sphi 0, %s87
      %s102 = sphi 0, %s88
      %s106 = sphi 0, %s106
      %s108 = sphi 0, %s106
      %s109 = sphi 0, %s108
      %s123 = sphi 0, %s109
      %s127 = sphi 0, %s127
      %s129 = sphi 0, %s127
      %s130 = sphi 0, %s129
      %s144 = sphi 0, %s130
      %s150 = sphi 0, %s152
      %s153 = sphi 0, %s150
      %s154 = sphi 0, %s153
      %s170 = sphi 0, %s154
    $region4: #{tpu_custom_call.1} parent=1 // loop_header_branch
      %19 = sbr.rel (%p17) target = $region8
    $region5: #{tpu_custom_call.1} parent=1 // loop_body
      %s21 = ssub.s32 %s16, 1
      %s22 = ssub.s32 %s16, 2
      %s29 = sadd.s32 1, %s24
      %p30 = scmp.ge.s32.totalorder %s29, 1
      %s31 = scalar_select %p30, 0, %s29
      %s32 = sadd.s32 1, %s23
      %s33 = scalar_select %p30, %s32, %s23
      %p34 = scmp.ge.s32.totalorder %s33, 2
      %s35 = scalar_select %p34, 0, %s33
      %s36 = ssub.s32 %s24, %s31
      %s37 = ssub.s32 %s23, %s35
      %s38 = sor.u32 %s36, %s37
      %p39 = scmp.eq.s32.totalorder %s38, 0
      %s41 = sadd.s32 %s40, 1
      %s42 = scalar_select %p39, %s40, %s41
      %p45 = pneg %p39
      %p46 = scmp.eq.s32.totalorder %s16, 1
      %p47 = por %p45, %p46
      %p48 = scmp.ne.s32.totalorder %s40, %s43
      %p49 = scmp.eq.s32.totalorder %s16, 0
      %p50 = por %p48, %p49
      %p51 = scmp.ne.s32.totalorder %s40, %s43
      %p52 = scmp.eq.s32.totalorder %s21, 1
      %p53 = por %p51, %p52
      %p54 = scmp.ne.s32.totalorder %s43, %s44
      %p55 = scmp.eq.s32.totalorder %s21, 0
      %p56 = por %p54, %p55
      %p57 = scmp.ne.s32.totalorder %s43, %s44
      %p58 = scmp.eq.s32.totalorder %s22, 1
      %p59 = por %p57, %p58
      %p61 = scmp.ne.s32.totalorder %s44, %s60
      %p62 = scmp.eq.s32.totalorder %s22, 0
      %p63 = por %p61, %p62
      %s65 = sadd.s32 %s64, 1
      %p68 = scmp.eq.s32.totalorder %s16, 1
      %p69 = scmp.ne.s32.totalorder %s64, %s66
      %p70 = scmp.eq.s32.totalorder %s16, 0
      %p71 = por %p69, %p70
      %p72 = scmp.ne.s32.totalorder %s64, %s66
      %p73 = scmp.eq.s32.totalorder %s21, 1
      %p74 = por %p72, %p73
      %p75 = scmp.ne.s32.totalorder %s66, %s67
      %p76 = scmp.eq.s32.totalorder %s21, 0
      %p77 = por %p75, %p76
      %p78 = scmp.ne.s32.totalorder %s66, %s67
      %p79 = scmp.eq.s32.totalorder %s22, 1
      %p80 = por %p78, %p79
      %p82 = scmp.ne.s32.totalorder %s67, %s81
      %p83 = scmp.eq.s32.totalorder %s22, 0
      %p84 = por %p82, %p83
      %s86 = sadd.s32 %s85, 1
      %p89 = scmp.eq.s32.totalorder %s16, 1
      %p90 = scmp.ne.s32.totalorder %s85, %s87
      %p91 = scmp.eq.s32.totalorder %s16, 0
      %p92 = por %p90, %p91
      %p93 = scmp.ne.s32.totalorder %s85, %s87
      %p94 = scmp.eq.s32.totalorder %s21, 1
      %p95 = por %p93, %p94
      %p96 = scmp.ne.s32.totalorder %s87, %s88
      %p97 = scmp.eq.s32.totalorder %s21, 0
      %p98 = por %p96, %p97
      %p99 = scmp.ne.s32.totalorder %s87, %s88
      %p100 = scmp.eq.s32.totalorder %s22, 1
      %p101 = por %p99, %p100
      %p103 = scmp.ne.s32.totalorder %s88, %s102
      %p104 = scmp.eq.s32.totalorder %s22, 0
      %p105 = por %p103, %p104
      %s107 = sadd.s32 %s106, 1
      %p110 = scmp.eq.s32.totalorder %s16, 1
      %p111 = scmp.ne.s32.totalorder %s106, %s108
      %p112 = scmp.eq.s32.totalorder %s16, 0
      %p113 = por %p111, %p112
      %p114 = scmp.ne.s32.totalorder %s106, %s108
      %p115 = scmp.eq.s32.totalorder %s21, 1
      %p116 = por %p114, %p115
      %p117 = scmp.ne.s32.totalorder %s108, %s109
      %p118 = scmp.eq.s32.totalorder %s21, 0
      %p119 = por %p117, %p118
      %p120 = scmp.ne.s32.totalorder %s108, %s109
      %p121 = scmp.eq.s32.totalorder %s22, 1
      %p122 = por %p120, %p121
      %p124 = scmp.ne.s32.totalorder %s109, %s123
      %p125 = scmp.eq.s32.totalorder %s22, 0
      %p126 = por %p124, %p125
      %s128 = sadd.s32 %s127, 1
      %p131 = scmp.eq.s32.totalorder %s16, 1
      %p132 = scmp.ne.s32.totalorder %s127, %s129
      %p133 = scmp.eq.s32.totalorder %s16, 0
      %p134 = por %p132, %p133
      %p135 = scmp.ne.s32.totalorder %s127, %s129
      %p136 = scmp.eq.s32.totalorder %s21, 1
      %p137 = por %p135, %p136
      %p138 = scmp.ne.s32.totalorder %s129, %s130
      %p139 = scmp.eq.s32.totalorder %s21, 0
      %p140 = por %p138, %p139
      %p141 = scmp.ne.s32.totalorder %s129, %s130
      %p142 = scmp.eq.s32.totalorder %s22, 1
      %p143 = por %p141, %p142
      %p145 = scmp.ne.s32.totalorder %s130, %s144
      %p146 = scmp.eq.s32.totalorder %s22, 0
      %p147 = por %p145, %p146
      %s148 = ssub.s32 %s23, %s35
      %p149 = scmp.eq.s32.totalorder %s148, 0
      %s151 = sadd.s32 %s150, 1
      %s152 = scalar_select %p149, %s150, %s151
      %p155 = pneg %p149
      %p156 = scmp.eq.s32.totalorder %s16, 1
      %p157 = por %p155, %p156
      %p158 = scmp.ne.s32.totalorder %s150, %s153
      %p159 = scmp.eq.s32.totalorder %s16, 0
      %p160 = por %p158, %p159
      %p161 = scmp.ne.s32.totalorder %s150, %s153
      %p162 = scmp.eq.s32.totalorder %s21, 1
      %p163 = por %p161, %p162
      %p164 = scmp.ne.s32.totalorder %s153, %s154
      %p165 = scmp.eq.s32.totalorder %s21, 0
      %p166 = por %p164, %p165
      %p167 = scmp.ne.s32.totalorder %s153, %s154
      %p168 = scmp.eq.s32.totalorder %s22, 1
      %p169 = por %p167, %p168
      %p171 = scmp.ne.s32.totalorder %s154, %s170
      %p172 = scmp.eq.s32.totalorder %s22, 0
      %p173 = por %p171, %p172
      %p174 = scmp.le.s32.totalorder 1, %s16
      %p175 = scmp.lt.s32.totalorder %s16, 3
      %p176 = pnand %p174, %p175
      %p177 = pneg %p176
      // Predicated region
      $region9: #{tpu_custom_call.1} parent=5 // pred_check
        _
      $region10: #{tpu_custom_call.1} parent=5 // pred_check_branch
        %179 = sbr.rel (%p176) target = $region12
      $region11: #{tpu_custom_call.1} parent=5 // pred_region
        %s180 = ssub.s32 %s16, 1
        // Predicated region
        $region13: #{tpu_custom_call.1} parent=11 // pred_check
          %p181 = pneg %p77
        $region14: #{tpu_custom_call.1} parent=11 // pred_check_branch
          %183 = sbr.rel (%p181) target = $region16
        $region15: #{tpu_custom_call.1} parent=11 // pred_region
          _
        $region16: #{tpu_custom_call.1} parent=11 // pred_fallthru
          _
        // Predicated region
        $region17: #{tpu_custom_call.1} parent=11 // pred_check
          %p184 = pneg %p98
        $region18: #{tpu_custom_call.1} parent=11 // pred_check_branch
          %186 = sbr.rel (%p184) target = $region20
        $region19: #{tpu_custom_call.1} parent=11 // pred_region
          _
        $region20: #{tpu_custom_call.1} parent=11 // pred_fallthru
          _
        // Predicated region
        $region21: #{tpu_custom_call.1} parent=11 // pred_check
          %p187 = pneg %p119
        $region22: #{tpu_custom_call.1} parent=11 // pred_check_branch
          %189 = sbr.rel (%p187) target = $region24
        $region23: #{tpu_custom_call.1} parent=11 // pred_region
          _
        $region24: #{tpu_custom_call.1} parent=11 // pred_fallthru
          _
        // Predicated region
        $region25: #{tpu_custom_call.1} parent=11 // pred_check
          %p190 = pneg %p140
        $region26: #{tpu_custom_call.1} parent=11 // pred_check_branch
          %192 = sbr.rel (%p190) target = $region28
        $region27: #{tpu_custom_call.1} parent=11 // pred_region
          _
        $region28: #{tpu_custom_call.1} parent=11 // pred_fallthru
          _
      $region12: #{tpu_custom_call.1} parent=5 // pred_fallthru
        _
      %p193 = scmp.lt.s32.totalorder %s16, 2
      // Predicated region
      $region29: #{tpu_custom_call.1} parent=5 // pred_check
        %p194 = pneg %p193
      $region30: #{tpu_custom_call.1} parent=5 // pred_check_branch
        %196 = sbr.rel (%p194) target = $region32
      $region31: #{tpu_custom_call.1} parent=5 // pred_region
        // Predicated region
        $region33: #{tpu_custom_call.1} parent=31 // pred_check
          %p197 = pneg %p50
        $region34: #{tpu_custom_call.1} parent=31 // pred_check_branch
          %199 = sbr.rel (%p197) target = $region36
        $region35: #{tpu_custom_call.1} parent=31 // pred_region
          %s200 = sand.u32 %s40, 1
          %s201 = scalar_lea.sflag [#allocation7], %s200
          %s202 = sand.u32 %s40, 1
          %s203 = smul.addr %s202, 64
          %s204 = scalar_lea.vmem [#allocation6], %s203
          %s205 = smul.u32 8, %s24
          %s207 = ssub.s32 1024, 1024
          %208 = vsyncadd %s201, %s207
          %s209 = smul.addr %s205, 2
          %s210 = sadd.s32 %s23, %s209
          %s211 = smul.addr %s210, 128
          %s212 = scalar_lea.hbm %s0, %s211
          %s213 = sshll.u32 %s204, 4
          %s214 = int_to_ptr.vmem [resolvable:$true] %s213
          %219 = dma.hbm_to_vmem [thread:$0]  %s212, 1024, %s214, %s201, 256, 128, 8
        $region36: #{tpu_custom_call.1} parent=31 // pred_fallthru
          _
      $region32: #{tpu_custom_call.1} parent=5 // pred_fallthru
        _
      %p220 = scmp.le.s32.totalorder 1, %s16
      %p221 = scmp.lt.s32.totalorder %s16, 3
      %p222 = pnand %p220, %p221
      %p223 = pneg %p222
      // Predicated region
      $region37: #{tpu_custom_call.1} parent=5 // pred_check
        _
      $region38: #{tpu_custom_call.1} parent=5 // pred_check_branch
        %225 = sbr.rel (%p222) target = $region40
      $region39: #{tpu_custom_call.1} parent=5 // pred_region
        %s226 = ssub.s32 %s16, 1
        %s227 = sand.u32 %s43, 1
        %s228 = scalar_lea.sflag [#allocation7], %s227
        %s229 = sand.u32 %s43, 1
        %s230 = smul.addr %s229, 64
        %s231 = scalar_lea.vmem [#allocation6], %s230
        // Predicated region
        $region41: #{tpu_custom_call.1} parent=39 // pred_check
          %p232 = pneg %p56
        $region42: #{tpu_custom_call.1} parent=39 // pred_check_branch
          %234 = sbr.rel (%p232) target = $region44
        $region43: #{tpu_custom_call.1} parent=39 // pred_region
          %235 = dma.done %s228, 1024
        $region44: #{tpu_custom_call.1} parent=39 // pred_fallthru
          _
        %s236 = sand.u32 %s43, 1
        %s237 = scalar_lea.sflag [#allocation7], %s236
        %s238 = sand.u32 %s43, 1
        %s239 = smul.addr %s238, 64
        %s240 = scalar_lea.vmem [#allocation6], %s239
        %p241 = pneg %p56
        %p242 = pneg %p53
        %p243 = pneg %p77
        %p244 = pneg %p74
        %p245 = pneg %p98
        %p246 = pneg %p95
        %p247 = pneg %p119
        %p248 = pneg %p116
        %p249 = pneg %p140
        %p250 = pneg %p137
        %p251 = pneg %p166
        %p252 = pneg %p163
        %p253 = scmp.lt.s32.totalorder %s25, 1
        %s254 = scalar_select %p253, %s25, 1
        %s255 = smul.addr %s254, 8
        %s256 = scalar_lea.vmem %s5, %s255
        %s257 = smul.u32 8, %s26
        %p258 = scmp.lt.s32.totalorder %s25, 1
        %s259 = scalar_select %p258, %s25, 1
        %s260 = smul.addr %s259, 8
        %s261 = scalar_lea.vmem %s5, %s260
        %p262 = scmp.eq.s32.totalorder %s26, 0
        // Predicated region
        $region45: #{tpu_custom_call.1} parent=39 // pred_check
          %p263 = pneg %p262
        $region46: #{tpu_custom_call.1} parent=39 // pred_check_branch
          %265 = sbr.rel (%p263) target = $region48
        $region47: #{tpu_custom_call.1} parent=39 // pred_region
          %vm266 = vcmask 261120
          %267 = vst.msk [vmem:[#allocation2] sm:$0xff] %vm266, 0.0
        $region48: #{tpu_custom_call.1} parent=39 // pred_fallthru
          _
        %v268 = vld [vmem:[%s231] sm:$0xff]
        %v269 = vld [vmem:[%s231 + $0x8] sm:$0xff]
        %v270 = vld [vmem:[%s231 + $0x10] sm:$0xff]
        %v271 = vld [vmem:[%s231 + $0x18] sm:$0xff]
        %v272 = vld [vmem:[%s231 + $0x20] sm:$0xff]
        %v273 = vld [vmem:[%s231 + $0x28] sm:$0xff]
        %v274 = vld [vmem:[%s231 + $0x30] sm:$0xff]
        %v275 = vld [vmem:[%s231 + $0x38] sm:$0xff]
        %v276 = vld [vmem:[%s1] sm:$0xff]
        %v277 = vld [vmem:[%s1 + $0x8] sm:$0xff]
        %v278 = vld [vmem:[%s1 + $0x10] sm:$0xff]
        %v279 = vld [vmem:[%s1 + $0x18] sm:$0xff]
        %v280 = vld [vmem:[%s2] sm:$0x1]
        %v282 = vlaneseq
        %v283 = vshrl.u32 %v282, 7
        %v284 = vsub.s32 0, %v283
        %v285 = vrot.slane %v280, %v284
        %vm287 = vcmask 261120
        %v289 = vsel %vm287, %v268, 0
        %v292 = vsel %vm287, %v269, 0
        %v295 = vsel %vm287, %v270, 0
        %v298 = vsel %vm287, %v271, 0
        %v301 = vsel %vm287, %v272, 0
        %v304 = vsel %vm287, %v273, 0
        %v307 = vsel %vm287, %v274, 0
        %v310 = vsel %vm287, %v275, 0
        %312 = vmatprep.subr.mxu0 0.0
        %313 = vmatpush1.msra.mxu0 %v276
        %314 = vmatprep.subr.mxu0 0.0
        %315 = vmatpush1.msra.mxu0 %v277
        %316 = vmatprep.subr.mxu0 0.0
        %317 = vmatpush1.msra.mxu0 %v278
        %318 = vmatprep.subr.mxu0 0.0
        %319 = vmatpush1.msra.mxu0 %v279
        %320 = vmatprep.subr.mxu0 0.0
        %321 = vmatpush1.msra.mxu0 0.0
        %322 = vmatprep.subr.mxu0 0.0
        %323 = vmatpush1.msra.mxu0 0.0
        %324 = vmatprep.subr.mxu0 0.0
        %325 = vmatpush1.msra.mxu0 0.0
        %326 = vmatprep.subr.mxu0 0.0
        %327 = vmatpush1.msra.mxu0 0.0
        %328 = vmatprep.subr.mxu0 0.0
        %329 = vmatpush1.msra.mxu0 0.0
        %330 = vmatprep.subr.mxu0 0.0
        %331 = vmatpush1.msra.mxu0 0.0
        %332 = vmatprep.subr.mxu0 0.0
        %333 = vmatpush1.msra.mxu0 0.0
        %334 = vmatprep.subr.mxu0 0.0
        %335 = vmatpush1.msra.mxu0 0.0
        %336 = vmatprep.subr.mxu0 0.0
        %337 = vmatpush1.msra.mxu0 0.0
        %338 = vmatprep.subr.mxu0 0.0
        %339 = vmatpush1.msra.mxu0 0.0
        %340 = vmatprep.subr.mxu0 0.0
        %341 = vmatpush1.msra.mxu0 0.0
        %342 = vmatprep.subr.mxu0 0.0
        %343 = vmatpush1.msra.mxu0 0.0
        %344 = vmatprep.subr.mxu0 0.0
        %345 = vmatpush1.msra.mxu0 0.0
        %346 = vmatprep.subr.mxu0 0.0
        %347 = vmatpush1.msra.mxu0 0.0
        %348 = vmatprep.subr.mxu0 0.0
        %349 = vmatpush1.msra.mxu0 0.0
        %350 = vmatprep.subr.mxu0 0.0
        %351 = vmatpush1.msra.mxu0 0.0
        %352 = vmatprep.subr.mxu0 0.0
        %353 = vmatpush1.msra.mxu0 0.0
        %354 = vmatprep.subr.mxu0 0.0
        %355 = vmatpush1.msra.mxu0 0.0
        %356 = vmatprep.subr.mxu0 0.0
        %357 = vmatpush1.msra.mxu0 0.0
        %358 = vmatprep.subr.mxu0 0.0
        %359 = vmatpush1.msra.mxu0 0.0
        %360 = vmatprep.subr.mxu0 0.0
        %361 = vmatpush1.msra.mxu0 0.0
        %362 = vmatprep.subr.mxu0 0.0
        %363 = vmatpush1.msra.mxu0 0.0
        %364 = vmatprep.subr.mxu0 0.0
        %365 = vmatpush1.msra.mxu0 0.0
        %366 = vmatprep.subr.mxu0 0.0
        %367 = vmatpush1.msra.mxu0 0.0
        %368 = vmatprep.subr.mxu0 0.0
        %369 = vmatpush1.msra.mxu0 0.0
        %370 = vmatprep.subr.mxu0 0.0
        %371 = vmatpush1.msra.mxu0 0.0
        %372 = vmatprep.subr.mxu0 0.0
        %373 = vmatpush1.msra.mxu0 0.0
        %374 = vmatprep.subr.mxu0 0.0
        %375 = vmatpush1.msra.mxu0 0.0
        %376 = vmatprep.mubr.f32.mxu0 0.0
        %377 = vmatmul.mubr.f32.gmra.mrb[0].mxu0 %v289
        %v378 = vpop.f32.mrb[0].mxu0
        %v379 = vadd.f32 %v285, %v378
        %v380 = vpop.f32.mrb[0].mxu0
        %381 = vmatprep.mubr.f32.mxu0 0.0
        %382 = vmatmul.mubr.f32.gmra.mrb[0].mxu0 %v292
        %v383 = vpop.f32.mrb[0].mxu0
        %v384 = vadd.f32 %v285, %v383
        %v385 = vpop.f32.mrb[0].mxu0
        %386 = vmatprep.mubr.f32.mxu0 0.0
        %387 = vmatmul.mubr.f32.gmra.mrb[0].mxu0 %v295
        %v388 = vpop.f32.mrb[0].mxu0
        %v389 = vadd.f32 %v285, %v388
        %v390 = vpop.f32.mrb[0].mxu0
        %391 = vmatprep.mubr.f32.mxu0 0.0
        %392 = vmatmul.mubr.f32.gmra.mrb[0].mxu0 %v298
        %v393 = vpop.f32.mrb[0].mxu0
        %v394 = vadd.f32 %v285, %v393
        %v395 = vpop.f32.mrb[0].mxu0
        %396 = vmatprep.mubr.f32.mxu0 0.0
        %397 = vmatmul.mubr.f32.gmra.mrb[0].mxu0 %v301
        %v398 = vpop.f32.mrb[0].mxu0
        %v399 = vadd.f32 %v285, %v398
        %v400 = vpop.f32.mrb[0].mxu0
        %401 = vmatprep.mubr.f32.mxu0 0.0
        %402 = vmatmul.mubr.f32.gmra.mrb[0].mxu0 %v304
        %v403 = vpop.f32.mrb[0].mxu0
        %v404 = vadd.f32 %v285, %v403
        %v405 = vpop.f32.mrb[0].mxu0
        %406 = vmatprep.mubr.f32.mxu0 0.0
        %407 = vmatmul.mubr.f32.gmra.mrb[0].mxu0 %v307
        %v408 = vpop.f32.mrb[0].mxu0
        %v409 = vadd.f32 %v285, %v408
        %v410 = vpop.f32.mrb[0].mxu0
        %411 = vmatprep.mubr.f32.mxu0 0.0
        %412 = vmatmul.mubr.f32.gmra.mrb[0].mxu0 %v310
        %v413 = vpop.f32.mrb[0].mxu0
        %v414 = vadd.f32 %v285, %v413
        %v415 = vpop.f32.mrb[0].mxu0
        %416 = vdwg.mxu0
        %v417 = vxor.u32 %v379, 2147483648
        %v418 = vxor.u32 %v384, 2147483648
        %v419 = vxor.u32 %v389, 2147483648
        %v420 = vxor.u32 %v394, 2147483648
        %v421 = vxor.u32 %v399, 2147483648
        %v422 = vxor.u32 %v404, 2147483648
        %v423 = vxor.u32 %v409, 2147483648
        %v424 = vxor.u32 %v414, 2147483648
        %v425 = vmul.f32 %v417, 1.442695
        %v426 = vpow.pop %v425
        %v427 = vmul.f32 %v418, 1.442695
        %v428 = vpow.pop %v427
        %v429 = vmul.f32 %v419, 1.442695
        %v430 = vpow.pop %v429
        %v431 = vmul.f32 %v420, 1.442695
        %v432 = vpow.pop %v431
        %v433 = vmul.f32 %v421, 1.442695
        %v434 = vpow.pop %v433
        %v435 = vmul.f32 %v422, 1.442695
        %v436 = vpow.pop %v435
        %v437 = vmul.f32 %v423, 1.442695
        %v438 = vpow.pop %v437
        %v439 = vmul.f32 %v424, 1.442695
        %v440 = vpow.pop %v439
        %v441 = vadd.f32 %v426, 1.0
        %v442 = vadd.f32 %v428, 1.0
        %v443 = vadd.f32 %v430, 1.0
        %v444 = vadd.f32 %v432, 1.0
        %v445 = vadd.f32 %v434, 1.0
        %v446 = vadd.f32 %v436, 1.0
        %v447 = vadd.f32 %v438, 1.0
        %v448 = vadd.f32 %v440, 1.0
        %v449 = vrcp.pop %v441
        %v450 = vmul.f32 1.0, %v449
        %v451 = vrcp.pop %v442
        %v452 = vmul.f32 1.0, %v451
        %v453 = vrcp.pop %v443
        %v454 = vmul.f32 1.0, %v453
        %v455 = vrcp.pop %v444
        %v456 = vmul.f32 1.0, %v455
        %v457 = vrcp.pop %v445
        %v458 = vmul.f32 1.0, %v457
        %v459 = vrcp.pop %v446
        %v460 = vmul.f32 1.0, %v459
        %v461 = vrcp.pop %v447
        %v462 = vmul.f32 1.0, %v461
        %v463 = vrcp.pop %v448
        %v464 = vmul.f32 1.0, %v463
        %473 = vrot.lane.b32.xlu0 %v450, 96
        %v474 = vpop.permute.xlu0 %473
        %475 = vrot.lane.b32.xlu0 %v452, 96
        %v476 = vpop.permute.xlu0 %475
        %477 = vrot.lane.b32.xlu0 %v454, 96
        %v478 = vpop.permute.xlu0 %477
        %479 = vrot.lane.b32.xlu0 %v456, 96
        %v480 = vpop.permute.xlu0 %479
        %481 = vrot.lane.b32.xlu0 %v458, 96
        %v482 = vpop.permute.xlu0 %481
        %483 = vrot.lane.b32.xlu0 %v460, 96
        %v484 = vpop.permute.xlu0 %483
        %485 = vrot.lane.b32.xlu0 %v462, 96
        %v486 = vpop.permute.xlu0 %485
        %487 = vrot.lane.b32.xlu0 %v464, 96
        %v488 = vpop.permute.xlu0 %487
        %v497 = vadd.f32 %v450, %v474
        %v498 = vadd.f32 %v452, %v476
        %v499 = vadd.f32 %v454, %v478
        %v500 = vadd.f32 %v456, %v480
        %v501 = vadd.f32 %v458, %v482
        %v502 = vadd.f32 %v460, %v484
        %v503 = vadd.f32 %v462, %v486
        %v504 = vadd.f32 %v464, %v488
        %v505 = vrcp.pop %v497
        %v506 = vrcp.pop %v498
        %v507 = vrcp.pop %v499
        %v508 = vrcp.pop %v500
        %v509 = vrcp.pop %v501
        %v510 = vrcp.pop %v502
        %v511 = vrcp.pop %v503
        %v512 = vrcp.pop %v504
        %v513 = vmul.f32 %v497, %v505
        %v514 = vmul.f32 %v498, %v506
        %v515 = vmul.f32 %v499, %v507
        %v516 = vmul.f32 %v500, %v508
        %v517 = vmul.f32 %v501, %v509
        %v518 = vmul.f32 %v502, %v510
        %v519 = vmul.f32 %v503, %v511
        %v520 = vmul.f32 %v504, %v512
        %v521 = vsub.f32 2.0, %v513
        %v522 = vsub.f32 2.0, %v514
        %v523 = vsub.f32 2.0, %v515
        %v524 = vsub.f32 2.0, %v516
        %v525 = vsub.f32 2.0, %v517
        %v526 = vsub.f32 2.0, %v518
        %v527 = vsub.f32 2.0, %v519
        %v528 = vsub.f32 2.0, %v520
        %v529 = vmul.f32 %v505, %v521
        %v530 = vmul.f32 %v506, %v522
        %v531 = vmul.f32 %v507, %v523
        %v532 = vmul.f32 %v508, %v524
        %v533 = vmul.f32 %v509, %v525
        %v534 = vmul.f32 %v510, %v526
        %v535 = vmul.f32 %v511, %v527
        %v536 = vmul.f32 %v512, %v528
        %v537 = vmul.f32 %v450, %v529
        %v538 = vmul.f32 %v452, %v530
        %v539 = vmul.f32 %v454, %v531
        %v540 = vmul.f32 %v456, %v532
        %v541 = vmul.f32 %v458, %v533
        %v542 = vmul.f32 %v460, %v534
        %v543 = vmul.f32 %v462, %v535
        %v544 = vmul.f32 %v464, %v536
        %553 = vrot.lane.b32.xlu0 %v529, 32
        %v554 = vpop.permute.xlu0 %553
        %555 = vrot.lane.b32.xlu0 %v530, 32
        %v556 = vpop.permute.xlu0 %555
        %557 = vrot.lane.b32.xlu0 %v531, 32
        %v558 = vpop.permute.xlu0 %557
        %559 = vrot.lane.b32.xlu0 %v532, 32
        %v560 = vpop.permute.xlu0 %559
        %561 = vrot.lane.b32.xlu0 %v533, 32
        %v562 = vpop.permute.xlu0 %561
        %563 = vrot.lane.b32.xlu0 %v534, 32
        %v564 = vpop.permute.xlu0 %563
        %565 = vrot.lane.b32.xlu0 %v535, 32
        %v566 = vpop.permute.xlu0 %565
        %567 = vrot.lane.b32.xlu0 %v536, 32
        %v568 = vpop.permute.xlu0 %567
        %v577 = vmul.f32 %v450, %v554
        %v578 = vmul.f32 %v452, %v556
        %v579 = vmul.f32 %v454, %v558
        %v580 = vmul.f32 %v456, %v560
        %v581 = vmul.f32 %v458, %v562
        %v582 = vmul.f32 %v460, %v564
        %v583 = vmul.f32 %v462, %v566
        %v584 = vmul.f32 %v464, %v568
        %593 = vrot.lane.b32.xlu0 %v379, 96
        %v594 = vpop.permute.xlu0 %593
        %595 = vrot.lane.b32.xlu0 %v384, 96
        %v596 = vpop.permute.xlu0 %595
        %597 = vrot.lane.b32.xlu0 %v389, 96
        %v598 = vpop.permute.xlu0 %597
        %599 = vrot.lane.b32.xlu0 %v394, 96
        %v600 = vpop.permute.xlu0 %599
        %601 = vrot.lane.b32.xlu0 %v399, 96
        %v602 = vpop.permute.xlu0 %601
        %603 = vrot.lane.b32.xlu0 %v404, 96
        %v604 = vpop.permute.xlu0 %603
        %605 = vrot.lane.b32.xlu0 %v409, 96
        %v606 = vpop.permute.xlu0 %605
        %607 = vrot.lane.b32.xlu0 %v414, 96
        %v608 = vpop.permute.xlu0 %607
        %v617 = vmul.f32 %v577, %v594
        %v618 = vmul.f32 %v578, %v596
        %v619 = vmul.f32 %v579, %v598
        %v620 = vmul.f32 %v580, %v600
        %v621 = vmul.f32 %v581, %v602
        %v622 = vmul.f32 %v582, %v604
        %v623 = vmul.f32 %v583, %v606
        %v624 = vmul.f32 %v584, %v608
        %625 = vst.msk [vmem:[#allocation3] sm:$0xff] %vm287, %v537
        %626 = vst.msk [vmem:[#allocation3 + $0x8] sm:$0xff] %vm287, %v538
        %627 = vst.msk [vmem:[#allocation3 + $0x10] sm:$0xff] %vm287, %v539
        %628 = vst.msk [vmem:[#allocation3 + $0x18] sm:$0xff] %vm287, %v540
        %629 = vst.msk [vmem:[#allocation3 + $0x20] sm:$0xff] %vm287, %v541
        %630 = vst.msk [vmem:[#allocation3 + $0x28] sm:$0xff] %vm287, %v542
        %631 = vst.msk [vmem:[#allocation3 + $0x30] sm:$0xff] %vm287, %v543
        %632 = vst.msk [vmem:[#allocation3 + $0x38] sm:$0xff] %vm287, %v544
        %641 = vrot.lane.b32.xlu0 %v617, 96
        %v642 = vpop.permute.xlu0 %641
        %643 = vrot.lane.b32.xlu0 %v618, 96
        %v644 = vpop.permute.xlu0 %643
        %645 = vrot.lane.b32.xlu0 %v619, 96
        %v646 = vpop.permute.xlu0 %645
        %647 = vrot.lane.b32.xlu0 %v620, 96
        %v648 = vpop.permute.xlu0 %647
        %649 = vrot.lane.b32.xlu0 %v621, 96
        %v650 = vpop.permute.xlu0 %649
        %651 = vrot.lane.b32.xlu0 %v622, 96
        %v652 = vpop.permute.xlu0 %651
        %653 = vrot.lane.b32.xlu0 %v623, 96
        %v654 = vpop.permute.xlu0 %653
        %655 = vrot.lane.b32.xlu0 %v624, 96
        %v656 = vpop.permute.xlu0 %655
        %665 = vst.msk [vmem:[#allocation4] sm:$0xff] %vm287, %v642
        %666 = vst.msk [vmem:[#allocation4 + $0x8] sm:$0xff] %vm287, %v644
        %667 = vst.msk [vmem:[#allocation4 + $0x10] sm:$0xff] %vm287, %v646
        %668 = vst.msk [vmem:[#allocation4 + $0x18] sm:$0xff] %vm287, %v648
        %669 = vst.msk [vmem:[#allocation4 + $0x20] sm:$0xff] %vm287, %v650
        %670 = vst.msk [vmem:[#allocation4 + $0x28] sm:$0xff] %vm287, %v652
        %671 = vst.msk [vmem:[#allocation4 + $0x30] sm:$0xff] %vm287, %v654
        %672 = vst.msk [vmem:[#allocation4 + $0x38] sm:$0xff] %vm287, %v656
        %v673 = vld [vmem:[#allocation2] sm:$0xff]
        %v674 = vld [vmem:[#allocation3] sm:$0xff]
        %v675 = vmul.f32 %v674, %v673
        %v676 = vld [vmem:[#allocation4] sm:$0xff]
        %v677 = vadd.f32 %v675, %v676
        %s678 = scalar_lea.vmem [#allocation3], 8
        %v679 = vld [vmem:[%s678] sm:$0xff]
        %v680 = vmul.f32 %v679, %v677
        %s681 = scalar_lea.vmem [#allocation4], 8
        %v682 = vld [vmem:[%s681] sm:$0xff]
        %v683 = vadd.f32 %v680, %v682
        %s684 = scalar_lea.vmem [#allocation3], 16
        %v685 = vld [vmem:[%s684] sm:$0xff]
        %v686 = vmul.f32 %v685, %v683
        %s687 = scalar_lea.vmem [#allocation4], 16
        %v688 = vld [vmem:[%s687] sm:$0xff]
        %v689 = vadd.f32 %v686, %v688
        %s690 = scalar_lea.vmem [#allocation3], 24
        %v691 = vld [vmem:[%s690] sm:$0xff]
        %v692 = vmul.f32 %v691, %v689
        %s693 = scalar_lea.vmem [#allocation4], 24
        %v694 = vld [vmem:[%s693] sm:$0xff]
        %v695 = vadd.f32 %v692, %v694
        %s696 = scalar_lea.vmem [#allocation3], 32
        %v697 = vld [vmem:[%s696] sm:$0xff]
        %v698 = vmul.f32 %v697, %v695
        %s699 = scalar_lea.vmem [#allocation4], 32
        %v700 = vld [vmem:[%s699] sm:$0xff]
        %v701 = vadd.f32 %v698, %v700
        %s702 = scalar_lea.vmem [#allocation3], 40
        %v703 = vld [vmem:[%s702] sm:$0xff]
        %v704 = vmul.f32 %v703, %v701
        %s705 = scalar_lea.vmem [#allocation4], 40
        %v706 = vld [vmem:[%s705] sm:$0xff]
        %v707 = vadd.f32 %v704, %v706
        %s708 = scalar_lea.vmem [#allocation3], 48
        %v709 = vld [vmem:[%s708] sm:$0xff]
        %v710 = vmul.f32 %v709, %v707
        %s711 = scalar_lea.vmem [#allocation4], 48
        %v712 = vld [vmem:[%s711] sm:$0xff]
        %v713 = vadd.f32 %v710, %v712
        %s714 = scalar_lea.vmem [#allocation3], 56
        %v715 = vld [vmem:[%s714] sm:$0xff]
        %v716 = vmul.f32 %v715, %v713
        %s717 = scalar_lea.vmem [#allocation4], 56
        %v718 = vld [vmem:[%s717] sm:$0xff]
        %v719 = vadd.f32 %v716, %v718
        %720 = vst.msk [vmem:[#allocation2] sm:$0xff] %vm287, %v719
        // Predicated region
        $region49: #{tpu_custom_call.1} parent=39 // pred_check
          %p721 = pneg %p262
        $region50: #{tpu_custom_call.1} parent=39 // pred_check_branch
          %723 = sbr.rel (%p721) target = $region52
        $region51: #{tpu_custom_call.1} parent=39 // pred_region
          %v724 = vld [vmem:[%s3] sm:$0xff]
          %v725 = vld [vmem:[%s3 + $0x8] sm:$0xff]
          %v726 = vld [vmem:[%s3 + $0x10] sm:$0xff]
          %v727 = vld [vmem:[%s3 + $0x18] sm:$0xff]
          %v728 = vld [vmem:[#allocation5] sm:$0x1]
          %v730 = vlaneseq
          %v731 = vshrl.u32 %v730, 7
          %v732 = vsub.s32 0, %v731
          %v733 = vrot.slane %v728, %v732
          %v736 = vsel %vm287, %v719, 0
          %738 = vmatprep.subr.mxu0 0.0
          %739 = vmatpush1.msra.mxu0 %v724
          %740 = vmatprep.subr.mxu0 0.0
          %741 = vmatpush1.msra.mxu0 %v725
          %742 = vmatprep.subr.mxu0 0.0
          %743 = vmatpush1.msra.mxu0 %v726
          %744 = vmatprep.subr.mxu0 0.0
          %745 = vmatpush1.msra.mxu0 %v727
          %746 = vmatprep.subr.mxu0 0.0
          %747 = vmatpush1.msra.mxu0 0.0
          %748 = vmatprep.subr.mxu0 0.0
          %749 = vmatpush1.msra.mxu0 0.0
          %750 = vmatprep.subr.mxu0 0.0
          %751 = vmatpush1.msra.mxu0 0.0
          %752 = vmatprep.subr.mxu0 0.0
          %753 = vmatpush1.msra.mxu0 0.0
          %754 = vmatprep.subr.mxu0 0.0
          %755 = vmatpush1.msra.mxu0 0.0
          %756 = vmatprep.subr.mxu0 0.0
          %757 = vmatpush1.msra.mxu0 0.0
          %758 = vmatprep.subr.mxu0 0.0
          %759 = vmatpush1.msra.mxu0 0.0
          %760 = vmatprep.subr.mxu0 0.0
          %761 = vmatpush1.msra.mxu0 0.0
          %762 = vmatprep.subr.mxu0 0.0
          %763 = vmatpush1.msra.mxu0 0.0
          %764 = vmatprep.subr.mxu0 0.0
          %765 = vmatpush1.msra.mxu0 0.0
          %766 = vmatprep.subr.mxu0 0.0
          %767 = vmatpush1.msra.mxu0 0.0
          %768 = vmatprep.subr.mxu0 0.0
          %769 = vmatpush1.msra.mxu0 0.0
          %770 = vmatprep.subr.mxu0 0.0
          %771 = vmatpush1.msra.mxu0 0.0
          %772 = vmatprep.subr.mxu0 0.0
          %773 = vmatpush1.msra.mxu0 0.0
          %774 = vmatprep.subr.mxu0 0.0
          %775 = vmatpush1.msra.mxu0 0.0
          %776 = vmatprep.subr.mxu0 0.0
          %777 = vmatpush1.msra.mxu0 0.0
          %778 = vmatprep.subr.mxu0 0.0
          %779 = vmatpush1.msra.mxu0 0.0
          %780 = vmatprep.subr.mxu0 0.0
          %781 = vmatpush1.msra.mxu0 0.0
          %782 = vmatprep.subr.mxu0 0.0
          %783 = vmatpush1.msra.mxu0 0.0
          %784 = vmatprep.subr.mxu0 0.0
          %785 = vmatpush1.msra.mxu0 0.0
          %786 = vmatprep.subr.mxu0 0.0
          %787 = vmatpush1.msra.mxu0 0.0
          %788 = vmatprep.subr.mxu0 0.0
          %789 = vmatpush1.msra.mxu0 0.0
          %790 = vmatprep.subr.mxu0 0.0
          %791 = vmatpush1.msra.mxu0 0.0
          %792 = vmatprep.subr.mxu0 0.0
          %793 = vmatpush1.msra.mxu0 0.0
          %794 = vmatprep.subr.mxu0 0.0
          %795 = vmatpush1.msra.mxu0 0.0
          %796 = vmatprep.subr.mxu0 0.0
          %797 = vmatpush1.msra.mxu0 0.0
          %798 = vmatprep.subr.mxu0 0.0
          %799 = vmatpush1.msra.mxu0 0.0
          %800 = vmatprep.subr.mxu0 0.0
          %801 = vmatpush1.msra.mxu0 0.0
          %802 = vmatprep.mubr.f32.mxu0 0.0
          %803 = vmatmul.mubr.f32.gmra.mrb[0].mxu0 %v736
          %v804 = vpop.f32.mrb[0].mxu0
          %v805 = vadd.f32 %v733, %v804
          %v806 = vpop.f32.mrb[0].mxu0
          %807 = vdwg.mxu0
          %v808 = vxor.u32 %v805, 2147483648
          %v809 = vmul.f32 %v808, 1.442695
          %v810 = vpow.pop %v809
          %v811 = vadd.f32 %v810, 1.0
          %v812 = vrcp.pop %v811
          %v813 = vmul.f32 1.0, %v812
          %vm814 = vcmask 7168
          %815 = vst.msk [vmem:[%s261] sm:$0xff] %vm814, %v813
        $region52: #{tpu_custom_call.1} parent=39 // pred_fallthru
          _
        %p816 = scmp.lt.s32.totalorder %s25, 1
        %s817 = scalar_select %p816, %s25, 1
        %s818 = smul.addr %s817, 8
        %s819 = scalar_lea.vmem %s5, %s818
        // Predicated region
        $region53: #{tpu_custom_call.1} parent=39 // pred_check
          %p820 = pneg %p163
        $region54: #{tpu_custom_call.1} parent=39 // pred_check_branch
          %822 = sbr.rel (%p820) target = $region56
        $region55: #{tpu_custom_call.1} parent=39 // pred_region
          _
        $region56: #{tpu_custom_call.1} parent=39 // pred_fallthru
          _
      $region40: #{tpu_custom_call.1} parent=5 // pred_fallthru
        _
      %p823 = scmp.le.s32.totalorder 2, %s16
      // Predicated region
      $region57: #{tpu_custom_call.1} parent=5 // pred_check
        %p824 = pneg %p823
      $region58: #{tpu_custom_call.1} parent=5 // pred_check_branch
        %826 = sbr.rel (%p824) target = $region60
      $region59: #{tpu_custom_call.1} parent=5 // pred_region
        %s827 = ssub.s32 %s16, 2
        // Predicated region
        $region61: #{tpu_custom_call.1} parent=59 // pred_check
          %p828 = pneg %p169
        $region62: #{tpu_custom_call.1} parent=59 // pred_check_branch
          %830 = sbr.rel (%p828) target = $region64
        $region63: #{tpu_custom_call.1} parent=59 // pred_region
          %p831 = scmp.lt.s32.totalorder %s27, 1
          %s832 = scalar_select %p831, %s27, 1
          %s833 = smul.addr %s832, 8
          %s834 = scalar_lea.vmem %s5, %s833
        $region64: #{tpu_custom_call.1} parent=59 // pred_fallthru
          _
      $region60: #{tpu_custom_call.1} parent=5 // pred_fallthru
        _
    $region6: #{tpu_custom_call.1} parent=1 // loop_footer
      %s20 = sadd.s32 1, %s16
    $region7: #{tpu_custom_call.1} parent=1 // loop_footer_branch
      %15 = sbr.rel target = $region3
    $region8: #{tpu_custom_call.1} parent=1 // loop_exit
      _
    %835 = vsyncpa [#allocation7], 1
    %s836 = scalar_lea.sflag [#allocation7], 1
    %837 = vsyncpa %s836, 1

</llo_original>
